<compile_context>
chip_gen: v5e
topology: v5e:2x2
jax: 0.10.0
libtpu: 0.0.40
codegen_flags: <defaults>
</compile_context>

<pallas_src>
import jax
import jax.numpy as jnp
from jax.experimental import pallas as pl
from jax.experimental.pallas import tpu as pltpu

N_META = 3


def mp_encoder_kernel(pro_ref, gwcat_ref, adjbd_ref, brows_ref, srows_ref,
                      fcw_ref, fcb_ref, beta_ref, out_ref):
    n, h = out_ref.shape  # static python ints

    # (1) all three GCN fc matmuls as ONE fat MXU push: (N,H) @ (H,3H) -> (N,3H)
    x_all = jnp.dot(pro_ref[...], gwcat_ref[...], preferred_element_type=jnp.float32)

    # rearrange to row-stacked (3N, H): block i <- lanes [i*H, (i+1)*H)
    x_rows = jnp.concatenate(
        [x_all[:, i * h:(i + 1) * h] for i in range(N_META)], axis=0)

    # (2) all three adjacency matmuls as ONE MXU push via the block-diag adjacency
    out_all = jnp.dot(adjbd_ref[...], x_rows, preferred_element_type=jnp.float32)
    out_all = out_all + brows_ref[...]                                     # GCN bias
    out_all = jnp.where(out_all >= 0.0, out_all, srows_ref[...] * out_all)  # PReLU

    # (3) attention logits: ONE stacked fc matmul + VPU beta contraction (no tiny dots)
    hpre = jnp.dot(out_all, fcw_ref[...], preferred_element_type=jnp.float32)
    hact = jnp.tanh(hpre + fcb_ref[...])                    # fc bias added once (hoisted)
    s = jnp.sum(hact * beta_ref[...], axis=1, keepdims=True)               # (3N, 1)

    inv_n = 1.0 / n
    logits = [jnp.sum(s[i * n:(i + 1) * n, :], axis=0, keepdims=True) * inv_n
              for i in range(N_META)]                                      # three (1,1)

    # softmax over the 3 meta-path logits
    m = jnp.maximum(jnp.maximum(logits[0], logits[1]), logits[2])
    e = [jnp.exp(l - m) for l in logits]
    inv = pl.reciprocal(e[0] + e[1] + e[2], approx=True)                   # EUP slot

    # weighted sum of the three meta-path embeddings (row blocks of out_all)
    z = (e[0] * inv) * out_all[0:n, :]
    z = z + (e[1] * inv) * out_all[n:2 * n, :]
    z = z + (e[2] * inv) * out_all[2 * n:3 * n, :]
    out_ref[...] = z


def _block_diag3(a):
    """(3, N, N) -> (3N, 3N) block-diagonal matrix (cheap wrapper-side XLA)."""
    m, n, _ = a.shape
    out = jnp.zeros((m * n, m * n), a.dtype)
    for i in range(m):
        out = out.at[i * n:(i + 1) * n, i * n:(i + 1) * n].set(a[i])
    return out


def mp_encoder_forward(pro, adjs, gcn_w, gcn_b, prelu_w, fc_w, fc_b, beta):
    N, H = pro.shape

    # Repack operands into the fused layouts.  The parameter-derived ones
    # (gw_cat, b_rows, s_rows, beta_r) are constant-foldable / hoistable when
    # this is embedded in a larger model; adj_bd is a cheap scatter of the input.
    gw_cat = jnp.concatenate([gcn_w[i] for i in range(N_META)], axis=1)    # (H, 3H)
    adj_bd = _block_diag3(adjs)                                            # (3N, 3N)
    b_rows = jnp.repeat(gcn_b, N, axis=0)                                  # (3N, H)
    s_rows = jnp.repeat(prelu_w.reshape(N_META, 1), N, axis=0)             # (3N, 1)
    beta_r = beta.reshape(1, H)                                            # (1, H)

    flops = 2 * (N * H * 3 * H            # fused GCN weight matmul
                 + (3 * N) * (3 * N) * H  # block-diag adjacency matmul
                 + (3 * N) * H * H        # stacked attention fc matmul
                 + 3 * N * H)             # beta contraction (VPU)
    transcendentals = 3 * N * H + 3       # tanh + exp
    bytes_accessed = 4 * (N * H + H * 3 * H + (3 * N) * (3 * N) + (3 * N) * H
                          + 3 * N + H * H + H + H + N * H)

    vmem = pl.BlockSpec(memory_space=pltpu.MemorySpace.VMEM)
    return pl.pallas_call(
        mp_encoder_kernel,
        out_shape=jax.ShapeDtypeStruct((N, H), jnp.float32),
        in_specs=[vmem] * 8,
        out_specs=vmem,
        cost_estimate=pl.CostEstimate(flops=flops,
                                      transcendentals=transcendentals,
                                      bytes_accessed=bytes_accessed),
    )(pro, gw_cat, adj_bd, b_rows, s_rows, fc_w, fc_b, beta_r)


def mp_encoder_ref(pro, adjs, gcn_w, gcn_b, prelu_w, fc_w, fc_b, beta):
    """Pure-JAX reference, mirrors the PyTorch forward (eval-mode dropout)."""
    metas, logits = [], []
    for i in range(N_META):
        x = pro @ gcn_w[i]
        out = adjs[i] @ x + gcn_b[i][None, :]
        out = jnp.where(out >= 0.0, out, prelu_w[i] * out)
        metas.append(out)
        h = jnp.tanh(out @ fc_w + fc_b)
        logits.append((jnp.mean(h, axis=0, keepdims=True) @ beta)[0, 0])
    attn = jax.nn.softmax(jnp.stack(logits))
    z = sum(attn[i] * metas[i] for i in range(N_META))
    return z


if __name__ == "__main__":
    N, H = 16, 32  # nodes, hidden
    key = jax.random.PRNGKey(0)
    k = jax.random.split(key, 8)

    # deterministic synthetic parameter init (shapes match the PyTorch module)
    pro = jax.random.normal(k[0], (N, H), jnp.float32)
    adjs = jax.random.uniform(k[1], (N_META, N, N), jnp.float32)
    adjs = adjs / jnp.sum(adjs, axis=-1, keepdims=True)        # row-normalized adjacency
    bound_g = (6.0 / (H + H)) ** 0.5                           # xavier_uniform
    gcn_w = jax.random.uniform(k[2], (N_META, H, H), jnp.float32, -bound_g, bound_g)
    gcn_b = jnp.zeros((N_META, H), jnp.float32)                # bias.data.fill_(0.0)
    prelu_w = jnp.full((N_META,), 0.25, jnp.float32)           # PReLU default slope (1D)
    fc_w = jax.random.uniform(k[3], (H, H), jnp.float32, -bound_g, bound_g)
    fc_b = jax.random.uniform(k[4], (1, H), jnp.float32, -1.0 / H ** 0.5, 1.0 / H ** 0.5)
    bound_b = 1.414 * (6.0 / (H + 1)) ** 0.5                   # xavier_uniform gain=1.414
    beta = jax.random.uniform(k[5], (H, 1), jnp.float32, -bound_b, bound_b)

    z = mp_encoder_forward(pro, adjs, gcn_w, gcn_b, prelu_w, fc_w, fc_b, beta)
    jax.block_until_ready(z)

    z_ref = mp_encoder_ref(pro, adjs, gcn_w, gcn_b, prelu_w, fc_w, fc_b, beta)
    assert z.shape == (N, H)
    # slightly looser tolerance to accommodate the EUP approximate reciprocal
    # used for the softmax denominator.
    assert jnp.allclose(z, z_ref, atol=2e-3, rtol=2e-3)
    print("KERNEL_OK")
</pallas_src>

<mosaic_0001>
module attributes {stable_mosaic.version = 11 : i64} {
  func.func @mp_encoder_kernel(%arg0: memref<16x32xf32, #tpu.memory_space<vmem>>, %arg1: memref<32x96xf32, #tpu.memory_space<vmem>>, %arg2: memref<48x48xf32, #tpu.memory_space<vmem>>, %arg3: memref<48x32xf32, #tpu.memory_space<vmem>>, %arg4: memref<48x1xf32, #tpu.memory_space<vmem>>, %arg5: memref<32x32xf32, #tpu.memory_space<vmem>>, %arg6: memref<1x32xf32, #tpu.memory_space<vmem>>, %arg7: memref<1x32xf32, #tpu.memory_space<vmem>>, %arg8: memref<16x32xf32, #tpu.memory_space<vmem>>) attributes {dimension_semantics = [], scalar_prefetch = 0 : i64, scratch_operands = 0 : i64, tpu.core_type = #tpu.core_type<tc>} {
    %c0 = arith.constant 0 : index
    %c0_0 = arith.constant 0 : index
    %0 = vector.load %arg0[%c0, %c0_0] : memref<16x32xf32, #tpu.memory_space<vmem>>, vector<16x32xf32>
    %c0_1 = arith.constant 0 : index
    %c0_2 = arith.constant 0 : index
    %1 = vector.load %arg1[%c0_1, %c0_2] : memref<32x96xf32, #tpu.memory_space<vmem>>, vector<32x96xf32>
    %cst = arith.constant dense<0.000000e+00> : vector<16x96xf32>
    %2 = tpu.matmul %0, %1, %cst {dimension_numbers = #tpu.dot_dimension_numbers<[1], [0], [0], [1], [0, 0, 1, 1], [], []>} : vector<16x32xf32>, vector<32x96xf32>, vector<16x96xf32> -> vector<16x96xf32>
    %3 = vector.extract_strided_slice %2 {offsets = [0, 0], sizes = [16, 32], strides = [1, 1]} : vector<16x96xf32> to vector<16x32xf32>
    %4 = vector.extract_strided_slice %2 {offsets = [0, 32], sizes = [16, 32], strides = [1, 1]} : vector<16x96xf32> to vector<16x32xf32>
    %5 = vector.extract_strided_slice %2 {offsets = [0, 64], sizes = [16, 32], strides = [1, 1]} : vector<16x96xf32> to vector<16x32xf32>
    %6 = tpu.concatenate %3, %4, %5 in 0 : vector<16x32xf32>, vector<16x32xf32>, vector<16x32xf32> -> vector<48x32xf32>
    %c0_3 = arith.constant 0 : index
    %c0_4 = arith.constant 0 : index
    %7 = vector.load %arg2[%c0_3, %c0_4] : memref<48x48xf32, #tpu.memory_space<vmem>>, vector<48x48xf32>
    %cst_5 = arith.constant dense<0.000000e+00> : vector<48x32xf32>
    %8 = tpu.matmul %7, %6, %cst_5 {dimension_numbers = #tpu.dot_dimension_numbers<[1], [0], [0], [1], [0, 0, 1, 1], [], []>} : vector<48x48xf32>, vector<48x32xf32>, vector<48x32xf32> -> vector<48x32xf32>
    %c0_6 = arith.constant 0 : index
    %c0_7 = arith.constant 0 : index
    %9 = vector.load %arg3[%c0_6, %c0_7] : memref<48x32xf32, #tpu.memory_space<vmem>>, vector<48x32xf32>
    %10 = arith.addf %8, %9 : vector<48x32xf32>
    %cst_8 = arith.constant 0.000000e+00 : f32
    %11 = vector.broadcast %cst_8 : f32 to vector<48x32xf32>
    %12 = arith.cmpf oge, %10, %11 : vector<48x32xf32>
    %c0_9 = arith.constant 0 : index
    %c0_10 = arith.constant 0 : index
    %13 = vector.load %arg4[%c0_9, %c0_10] : memref<48x1xf32, #tpu.memory_space<vmem>>, vector<48x1xf32>
    %14 = vector.broadcast %13 : vector<48x1xf32> to vector<48x32xf32>
    %15 = arith.mulf %14, %10 : vector<48x32xf32>
    %16 = arith.select %12, %10, %15 : vector<48x32xi1>, vector<48x32xf32>
    %c0_11 = arith.constant 0 : index
    %c0_12 = arith.constant 0 : index
    %17 = vector.load %arg5[%c0_11, %c0_12] : memref<32x32xf32, #tpu.memory_space<vmem>>, vector<32x32xf32>
    %cst_13 = arith.constant dense<0.000000e+00> : vector<48x32xf32>
    %18 = tpu.matmul %16, %17, %cst_13 {dimension_numbers = #tpu.dot_dimension_numbers<[1], [0], [0], [1], [0, 0, 1, 1], [], []>} : vector<48x32xf32>, vector<32x32xf32>, vector<48x32xf32> -> vector<48x32xf32>
    %c0_14 = arith.constant 0 : index
    %c0_15 = arith.constant 0 : index
    %19 = vector.load %arg6[%c0_14, %c0_15] : memref<1x32xf32, #tpu.memory_space<vmem>>, vector<1x32xf32>
    %20 = vector.broadcast %19 : vector<1x32xf32> to vector<48x32xf32>
    %21 = arith.addf %18, %20 : vector<48x32xf32>
    %22 = math.tanh %21 : vector<48x32xf32>
    %c0_16 = arith.constant 0 : index
    %c0_17 = arith.constant 0 : index
    %23 = vector.load %arg7[%c0_16, %c0_17] : memref<1x32xf32, #tpu.memory_space<vmem>>, vector<1x32xf32>
    %24 = vector.broadcast %23 : vector<1x32xf32> to vector<48x32xf32>
    %25 = arith.mulf %22, %24 : vector<48x32xf32>
    %cst_18 = arith.constant dense<0.000000e+00> : vector<48xf32>
    %26 = vector.multi_reduction <add>, %25, %cst_18 [1] : vector<48x32xf32> to vector<48xf32>
    %27 = vector.shape_cast %26 : vector<48xf32> to vector<48x1xf32>
    %28 = vector.extract_strided_slice %27 {offsets = [0, 0], sizes = [16, 1], strides = [1, 1]} : vector<48x1xf32> to vector<16x1xf32>
    %cst_19 = arith.constant dense<0.000000e+00> : vector<1xf32>
    %29 = vector.multi_reduction <add>, %28, %cst_19 [0] : vector<16x1xf32> to vector<1xf32>
    %30 = vector.shape_cast %29 : vector<1xf32> to vector<1x1xf32>
    %cst_20 = arith.constant 6.250000e-02 : f32
    %31 = vector.broadcast %cst_20 : f32 to vector<1x1xf32>
    %32 = arith.mulf %30, %31 : vector<1x1xf32>
    %33 = vector.extract_strided_slice %27 {offsets = [16, 0], sizes = [16, 1], strides = [1, 1]} : vector<48x1xf32> to vector<16x1xf32>
    %cst_21 = arith.constant dense<0.000000e+00> : vector<1xf32>
    %34 = vector.multi_reduction <add>, %33, %cst_21 [0] : vector<16x1xf32> to vector<1xf32>
    %35 = vector.shape_cast %34 : vector<1xf32> to vector<1x1xf32>
    %cst_22 = arith.constant 6.250000e-02 : f32
    %36 = vector.broadcast %cst_22 : f32 to vector<1x1xf32>
    %37 = arith.mulf %35, %36 : vector<1x1xf32>
    %38 = vector.extract_strided_slice %27 {offsets = [32, 0], sizes = [16, 1], strides = [1, 1]} : vector<48x1xf32> to vector<16x1xf32>
    %cst_23 = arith.constant dense<0.000000e+00> : vector<1xf32>
    %39 = vector.multi_reduction <add>, %38, %cst_23 [0] : vector<16x1xf32> to vector<1xf32>
    %40 = vector.shape_cast %39 : vector<1xf32> to vector<1x1xf32>
    %cst_24 = arith.constant 6.250000e-02 : f32
    %41 = vector.broadcast %cst_24 : f32 to vector<1x1xf32>
    %42 = arith.mulf %40, %41 : vector<1x1xf32>
    %43 = arith.maximumf %32, %37 : vector<1x1xf32>
    %44 = arith.maximumf %43, %42 : vector<1x1xf32>
    %45 = arith.subf %32, %44 : vector<1x1xf32>
    %46 = math.exp %45 : vector<1x1xf32>
    %47 = arith.subf %37, %44 : vector<1x1xf32>
    %48 = math.exp %47 : vector<1x1xf32>
    %49 = arith.subf %42, %44 : vector<1x1xf32>
    %50 = math.exp %49 : vector<1x1xf32>
    %51 = arith.addf %46, %48 : vector<1x1xf32>
    %52 = arith.addf %51, %50 : vector<1x1xf32>
    %53 = tpu.reciprocal %52 {approx = true} : vector<1x1xf32> -> vector<1x1xf32>
    %54 = arith.mulf %46, %53 : vector<1x1xf32>
    %55 = vector.extract_strided_slice %16 {offsets = [0, 0], sizes = [16, 32], strides = [1, 1]} : vector<48x32xf32> to vector<16x32xf32>
    %56 = vector.broadcast %54 : vector<1x1xf32> to vector<16x32xf32>
    %57 = arith.mulf %56, %55 : vector<16x32xf32>
    %58 = arith.mulf %48, %53 : vector<1x1xf32>
    %59 = vector.extract_strided_slice %16 {offsets = [16, 0], sizes = [16, 32], strides = [1, 1]} : vector<48x32xf32> to vector<16x32xf32>
    %60 = vector.broadcast %58 : vector<1x1xf32> to vector<16x32xf32>
    %61 = arith.mulf %60, %59 : vector<16x32xf32>
    %62 = arith.addf %57, %61 : vector<16x32xf32>
    %63 = arith.mulf %50, %53 : vector<1x1xf32>
    %64 = vector.extract_strided_slice %16 {offsets = [32, 0], sizes = [16, 32], strides = [1, 1]} : vector<48x32xf32> to vector<16x32xf32>
    %65 = vector.broadcast %63 : vector<1x1xf32> to vector<16x32xf32>
    %66 = arith.mulf %65, %64 : vector<16x32xf32>
    %67 = arith.addf %62, %66 : vector<16x32xf32>
    %c0_25 = arith.constant 0 : index
    %c0_26 = arith.constant 0 : index
    %68 = vector.load %arg8[%c0_25, %c0_26] : memref<16x32xf32, #tpu.memory_space<vmem>>, vector<16x32xf32>
    tpu.vector_store %arg8[%c0_25, %c0_26], %67 {strides = array<i32>} : memref<16x32xf32, #tpu.memory_space<vmem>>, vector<16x32xf32>,
    return
  }
}

</mosaic_0001>

<llo_original>
// kernel: tpu_custom_call.1
$region0: #{tpu_custom_call.1}
  #allocation0 [shape = 'u32[]', space=smem, size = 0x4, offset = 0x4, fixed_abs, tag = 'smem constant byte address 0x4 - core index']
  #allocation1 [shape = 'u32[72,128]{1,0:T(1,128)}', space=vmem, size = 0x9000, scoped, tag = 'internal scratch']
  %s0 = inlined_call_operand.vmem [shape: f32[16,32], index: 0, kind: input, shape index: {}]
  %s1 = inlined_call_operand.vmem [shape: f32[32,96], index: 1, kind: input, shape index: {}]
  %s2 = inlined_call_operand.vmem [shape: f32[48,48], index: 2, kind: input, shape index: {}]
  %s3 = inlined_call_operand.vmem [shape: f32[48,32], index: 3, kind: input, shape index: {}]
  %s4 = inlined_call_operand.vmem [shape: f32[48,1], index: 4, kind: input, shape index: {}]
  %s5 = inlined_call_operand.vmem [shape: f32[32,32], index: 5, kind: input, shape index: {}]
  %s6 = inlined_call_operand.vmem [shape: f32[1,32], index: 6, kind: input, shape index: {}]
  %s7 = inlined_call_operand.vmem [shape: f32[1,32], index: 7, kind: input, shape index: {}]
  %s8 = inlined_call_operand.hbm [shape: f32[16,32], index: 8, kind: output, shape index: {}]
  %s9 = sld [smem:[#allocation0]]
  $region42: #{tpu_custom_call.1} parent=0
    _
  %s11 = ssub.s32 1, %s9
  %s12 = scalar_select 0, %s11, %s9
  $region1: #{tpu_custom_call.1} parent=0
    #allocation2 [shape = 'u8[8192]{0}', space=vmem, size = 0x2000, scoped, tag = 'output window, operand 0, single buffered']
    #allocation3 [shape = 's32[1]{0}', space=sflag, size = 0x4, scoped, tag = 'scoped memory for tpu_custom_call.1']
    %13 = vsyncpa [#allocation3], 0
    // Predicated region
    $region2: #{tpu_custom_call.1} parent=1 // pred_check
      _
    $region3: #{tpu_custom_call.1} parent=1 // pred_check_branch
      %15 = sbr.rel (0) target = $region5
    $region4: #{tpu_custom_call.1} parent=1 // pred_region
      _
    $region5: #{tpu_custom_call.1} parent=1 // pred_fallthru
      _
    // Predicated region
    $region6: #{tpu_custom_call.1} parent=1 // pred_check
      _
    $region7: #{tpu_custom_call.1} parent=1 // pred_check_branch
      %17 = sbr.rel (0) target = $region9
    $region8: #{tpu_custom_call.1} parent=1 // pred_region
      _
    $region9: #{tpu_custom_call.1} parent=1 // pred_fallthru
      _
    // Predicated region
    $region10: #{tpu_custom_call.1} parent=1 // pred_check
      _
    $region11: #{tpu_custom_call.1} parent=1 // pred_check_branch
      %19 = sbr.rel (0) target = $region13
    $region12: #{tpu_custom_call.1} parent=1 // pred_region
      _
    $region13: #{tpu_custom_call.1} parent=1 // pred_fallthru
      _
    // Predicated region
    $region14: #{tpu_custom_call.1} parent=1 // pred_check
      _
    $region15: #{tpu_custom_call.1} parent=1 // pred_check_branch
      %21 = sbr.rel (0) target = $region17
    $region16: #{tpu_custom_call.1} parent=1 // pred_region
      _
    $region17: #{tpu_custom_call.1} parent=1 // pred_fallthru
      _
    // Predicated region
    $region18: #{tpu_custom_call.1} parent=1 // pred_check
      _
    $region19: #{tpu_custom_call.1} parent=1 // pred_check_branch
      %23 = sbr.rel (0) target = $region21
    $region20: #{tpu_custom_call.1} parent=1 // pred_region
      _
    $region21: #{tpu_custom_call.1} parent=1 // pred_fallthru
      _
    // Predicated region
    $region22: #{tpu_custom_call.1} parent=1 // pred_check
      _
    $region23: #{tpu_custom_call.1} parent=1 // pred_check_branch
      %25 = sbr.rel (0) target = $region25
    $region24: #{tpu_custom_call.1} parent=1 // pred_region
      _
    $region25: #{tpu_custom_call.1} parent=1 // pred_fallthru
      _
    // Predicated region
    $region26: #{tpu_custom_call.1} parent=1 // pred_check
      _
    $region27: #{tpu_custom_call.1} parent=1 // pred_check_branch
      %27 = sbr.rel (0) target = $region29
    $region28: #{tpu_custom_call.1} parent=1 // pred_region
      _
    $region29: #{tpu_custom_call.1} parent=1 // pred_fallthru
      _
    // Predicated region
    $region30: #{tpu_custom_call.1} parent=1 // pred_check
      _
    $region31: #{tpu_custom_call.1} parent=1 // pred_check_branch
      %29 = sbr.rel (0) target = $region33
    $region32: #{tpu_custom_call.1} parent=1 // pred_region
      _
    $region33: #{tpu_custom_call.1} parent=1 // pred_fallthru
      _
    %v30 = vld [vmem:[%s0] sm:$0xff]
    %v31 = vld [vmem:[%s0 + $0x8] sm:$0xff]
    %v32 = vld [vmem:[%s1] sm:$0xff]
    %v33 = vld [vmem:[%s1 + $0x8] sm:$0xff]
    %v34 = vld [vmem:[%s1 + $0x10] sm:$0xff]
    %v35 = vld [vmem:[%s1 + $0x18] sm:$0xff]
    %vm36 = vcmask 261120
    %v38 = vsel %vm36, %v30, 0
    %v41 = vsel %vm36, %v31, 0
    %43 = vmatpush.msra.mxu0 0.0
    %44 = vmatpush.msra.mxu0 0.0
    %45 = vmatpush.msra.mxu0 0.0
    %46 = vmatpush.msra.mxu0 0.0
    %47 = vmatpush.msra.mxu0 0.0
    %48 = vmatpush.msra.mxu0 0.0
    %49 = vmatpush.msra.mxu0 0.0
    %50 = vmatpush.msra.mxu0 0.0
    %51 = vmatpush.msra.mxu0 0.0
    %52 = vmatpush.msra.mxu0 0.0
    %53 = vmatpush.msra.mxu0 0.0
    %54 = vmatpush.msra.mxu0 0.0
    %55 = vmatpush.msra.mxu0 %v35
    %56 = vmatpush.msra.mxu0 %v34
    %57 = vmatpush.msra.mxu0 %v33
    %58 = vmatpush.msra.mxu0 %v32
    %59 = vmatmul.f32.gmra.mxu0 %v38
    %v60 = vpop.f32.mrf.mxu0
    %v61 = vadd.f32 0.0, %v60
    %62 = vmatmul.f32.gmra.mxu0 %v41
    %v63 = vpop.f32.mrf.mxu0
    %v64 = vadd.f32 0.0, %v63
    %65 = vdwg.mxu0
    %68 = vrot.lane.b32.xlu0 %v61, 96
    %v69 = vpop.permute.xlu0 %68
    %70 = vrot.lane.b32.xlu0 %v64, 96
    %v71 = vpop.permute.xlu0 %70
    %74 = vrot.lane.b32.xlu0 %v61, 64
    %v75 = vpop.permute.xlu0 %74
    %76 = vrot.lane.b32.xlu0 %v64, 64
    %v77 = vpop.permute.xlu0 %76
    %v80 = vld [vmem:[%s2] sm:$0xff]
    %v81 = vld [vmem:[%s2 + $0x8] sm:$0xff]
    %v82 = vld [vmem:[%s2 + $0x10] sm:$0xff]
    %v83 = vld [vmem:[%s2 + $0x18] sm:$0xff]
    %v84 = vld [vmem:[%s2 + $0x20] sm:$0xff]
    %v85 = vld [vmem:[%s2 + $0x28] sm:$0xff]
    %v86 = vld [vmem:[%s3] sm:$0xff]
    %v87 = vld [vmem:[%s3 + $0x8] sm:$0xff]
    %v88 = vld [vmem:[%s3 + $0x10] sm:$0xff]
    %v89 = vld [vmem:[%s3 + $0x18] sm:$0xff]
    %v90 = vld [vmem:[%s3 + $0x20] sm:$0xff]
    %v91 = vld [vmem:[%s3 + $0x28] sm:$0xff]
    %vm92 = vcmask 392192
    %v94 = vsel %vm92, %v80, 0
    %v97 = vsel %vm92, %v81, 0
    %v100 = vsel %vm92, %v82, 0
    %v103 = vsel %vm92, %v83, 0
    %v106 = vsel %vm92, %v84, 0
    %v109 = vsel %vm92, %v85, 0
    %111 = vmatpush.msra.mxu0 0.0
    %112 = vmatpush.msra.mxu0 0.0
    %113 = vmatpush.msra.mxu0 0.0
    %114 = vmatpush.msra.mxu0 0.0
    %115 = vmatpush.msra.mxu0 0.0
    %116 = vmatpush.msra.mxu0 0.0
    %117 = vmatpush.msra.mxu0 0.0
    %118 = vmatpush.msra.mxu0 0.0
    %119 = vmatpush.msra.mxu0 0.0
    %120 = vmatpush.msra.mxu0 0.0
    %121 = vmatpush.msra.mxu0 %v77
    %122 = vmatpush.msra.mxu0 %v75
    %123 = vmatpush.msra.mxu0 %v71
    %124 = vmatpush.msra.mxu0 %v69
    %125 = vmatpush.msra.mxu0 %v64
    %126 = vmatpush.msra.mxu0 %v61
    %127 = vmatmul.f32.gmra.mxu0 %v94
    %v128 = vpop.f32.mrf.mxu0
    %v129 = vadd.f32 %v86, %v128
    %130 = vmatmul.f32.gmra.mxu0 %v97
    %v131 = vpop.f32.mrf.mxu0
    %v132 = vadd.f32 %v87, %v131
    %133 = vmatmul.f32.gmra.mxu0 %v100
    %v134 = vpop.f32.mrf.mxu0
    %v135 = vadd.f32 %v88, %v134
    %136 = vmatmul.f32.gmra.mxu0 %v103
    %v137 = vpop.f32.mrf.mxu0
    %v138 = vadd.f32 %v89, %v137
    %139 = vmatmul.f32.gmra.mxu0 %v106
    %v140 = vpop.f32.mrf.mxu0
    %v141 = vadd.f32 %v90, %v140
    %142 = vmatmul.f32.gmra.mxu0 %v109
    %v143 = vpop.f32.mrf.mxu0
    %v144 = vadd.f32 %v91, %v143
    %145 = vdwg.mxu0
    %vm146 = vcmp.ge.f32.partialorder %v129, 0.0
    %vm147 = vcmp.ge.f32.partialorder %v132, 0.0
    %vm148 = vcmp.ge.f32.partialorder %v135, 0.0
    %vm149 = vcmp.ge.f32.partialorder %v138, 0.0
    %vm150 = vcmp.ge.f32.partialorder %v141, 0.0
    %vm151 = vcmp.ge.f32.partialorder %v144, 0.0
    %v152 = vld [vmem:[%s4] sm:$0xff]
    %v153 = vld [vmem:[%s4 + $0x8] sm:$0xff]
    %v154 = vld [vmem:[%s4 + $0x10] sm:$0xff]
    %v155 = vld [vmem:[%s4 + $0x18] sm:$0xff]
    %v156 = vld [vmem:[%s4 + $0x20] sm:$0xff]
    %v157 = vld [vmem:[%s4 + $0x28] sm:$0xff]
    %159 = vset.pattern.permute.xlu0 0
    %160 = vperm.xlu0 %159, %v152
    %v161 = vpop.permute.xlu0 %160
    %164 = vset.pattern.permute.xlu0 0
    %165 = vperm.xlu0 %164, %v153
    %v166 = vpop.permute.xlu0 %165
    %169 = vset.pattern.permute.xlu0 0
    %170 = vperm.xlu0 %169, %v154
    %v171 = vpop.permute.xlu0 %170
    %174 = vset.pattern.permute.xlu0 0
    %175 = vperm.xlu0 %174, %v155
    %v176 = vpop.permute.xlu0 %175
    %179 = vset.pattern.permute.xlu0 0
    %180 = vperm.xlu0 %179, %v156
    %v181 = vpop.permute.xlu0 %180
    %184 = vset.pattern.permute.xlu0 0
    %185 = vperm.xlu0 %184, %v157
    %v186 = vpop.permute.xlu0 %185
    %v188 = vmul.f32 %v161, %v129
    %v189 = vmul.f32 %v166, %v132
    %v190 = vmul.f32 %v171, %v135
    %v191 = vmul.f32 %v176, %v138
    %v192 = vmul.f32 %v181, %v141
    %v193 = vmul.f32 %v186, %v144
    %v194 = vsel %vm146, %v129, %v188
    %v195 = vsel %vm147, %v132, %v189
    %v196 = vsel %vm148, %v135, %v190
    %v197 = vsel %vm149, %v138, %v191
    %v198 = vsel %vm150, %v141, %v192
    %v199 = vsel %vm151, %v144, %v193
    %v200 = vld [vmem:[%s5] sm:$0xff]
    %v201 = vld [vmem:[%s5 + $0x8] sm:$0xff]
    %v202 = vld [vmem:[%s5 + $0x10] sm:$0xff]
    %v203 = vld [vmem:[%s5 + $0x18] sm:$0xff]
    %v204 = vld [vmem:[%s6] sm:$0x1]
    %v206 = vperm.slane %v204, 0
    %v209 = vsel %vm36, %v194, 0
    %v212 = vsel %vm36, %v195, 0
    %v215 = vsel %vm36, %v196, 0
    %v218 = vsel %vm36, %v197, 0
    %v221 = vsel %vm36, %v198, 0
    %v224 = vsel %vm36, %v199, 0
    %226 = vmatpush.msra.mxu0 0.0
    %227 = vmatpush.msra.mxu0 0.0
    %228 = vmatpush.msra.mxu0 0.0
    %229 = vmatpush.msra.mxu0 0.0
    %230 = vmatpush.msra.mxu0 0.0
    %231 = vmatpush.msra.mxu0 0.0
    %232 = vmatpush.msra.mxu0 0.0
    %233 = vmatpush.msra.mxu0 0.0
    %234 = vmatpush.msra.mxu0 0.0
    %235 = vmatpush.msra.mxu0 0.0
    %236 = vmatpush.msra.mxu0 0.0
    %237 = vmatpush.msra.mxu0 0.0
    %238 = vmatpush.msra.mxu0 %v203
    %239 = vmatpush.msra.mxu0 %v202
    %240 = vmatpush.msra.mxu0 %v201
    %241 = vmatpush.msra.mxu0 %v200
    %242 = vmatmul.f32.gmra.mxu0 %v209
    %v243 = vpop.f32.mrf.mxu0
    %v244 = vadd.f32 %v206, %v243
    %245 = vmatmul.f32.gmra.mxu0 %v212
    %v246 = vpop.f32.mrf.mxu0
    %v247 = vadd.f32 %v206, %v246
    %248 = vmatmul.f32.gmra.mxu0 %v215
    %v249 = vpop.f32.mrf.mxu0
    %v250 = vadd.f32 %v206, %v249
    %251 = vmatmul.f32.gmra.mxu0 %v218
    %v252 = vpop.f32.mrf.mxu0
    %v253 = vadd.f32 %v206, %v252
    %254 = vmatmul.f32.gmra.mxu0 %v221
    %v255 = vpop.f32.mrf.mxu0
    %v256 = vadd.f32 %v206, %v255
    %257 = vmatmul.f32.gmra.mxu0 %v224
    %v258 = vpop.f32.mrf.mxu0
    %v259 = vadd.f32 %v206, %v258
    %260 = vdwg.mxu0
    %v261 = vtanh.pop %v244
    %v262 = vtanh.pop %v247
    %v263 = vtanh.pop %v250
    %v264 = vtanh.pop %v253
    %v265 = vtanh.pop %v256
    %v266 = vtanh.pop %v259
    %v267 = vld [vmem:[%s7] sm:$0x1]
    %v269 = vperm.slane %v267, 0
    %v271 = vmul.f32 %v261, %v269
    %v272 = vmul.f32 %v262, %v269
    %v273 = vmul.f32 %v263, %v269
    %v274 = vmul.f32 %v264, %v269
    %v275 = vmul.f32 %v265, %v269
    %v276 = vmul.f32 %v266, %v269
    %v277 = vsel %vm36, %v271, 0.0
    %278 = vadd.xlane.f32.xlu0 %v277
    %v279 = vpop.xlane.xlu0 %278
    %v280 = vsel %vm36, %v272, 0.0
    %281 = vadd.xlane.f32.xlu0 %v280
    %v282 = vpop.xlane.xlu0 %281
    %v283 = vsel %vm36, %v273, 0.0
    %284 = vadd.xlane.f32.xlu0 %v283
    %v285 = vpop.xlane.xlu0 %284
    %v286 = vsel %vm36, %v274, 0.0
    %287 = vadd.xlane.f32.xlu0 %v286
    %v288 = vpop.xlane.xlu0 %287
    %v289 = vsel %vm36, %v275, 0.0
    %290 = vadd.xlane.f32.xlu0 %v289
    %v291 = vpop.xlane.xlu0 %290
    %v292 = vsel %vm36, %v276, 0.0
    %293 = vadd.xlane.f32.xlu0 %v292
    %v294 = vpop.xlane.xlu0 %293
    %v295 = vadd.f32 %v279, %v282
    %v296 = vrot.slane %v295, 4
    %v297 = vadd.f32 %v295, %v296
    %v298 = vrot.slane %v297, 2
    %v299 = vadd.f32 %v297, %v298
    %v300 = vrot.slane %v299, 1
    %v301 = vadd.f32 %v299, %v300
    %v302 = vmul.f32 %v301, 0.0625
    %v303 = vadd.f32 %v285, %v288
    %v304 = vrot.slane %v303, 4
    %v305 = vadd.f32 %v303, %v304
    %v306 = vrot.slane %v305, 2
    %v307 = vadd.f32 %v305, %v306
    %v308 = vrot.slane %v307, 1
    %v309 = vadd.f32 %v307, %v308
    %v310 = vmul.f32 %v309, 0.0625
    %v311 = vadd.f32 %v291, %v294
    %v312 = vrot.slane %v311, 4
    %v313 = vadd.f32 %v311, %v312
    %v314 = vrot.slane %v313, 2
    %v315 = vadd.f32 %v313, %v314
    %v316 = vrot.slane %v315, 1
    %v317 = vadd.f32 %v315, %v316
    %v318 = vmul.f32 %v317, 0.0625
    %v319 = vmax.f32 %v302, %v310
    %v320 = vmax.f32 %v319, %v318
    %v321 = vsub.f32 %v302, %v320
    %v322 = vmul.f32 %v321, 1.442695
    %v323 = vpow.pop %v322
    %v324 = vsub.f32 %v310, %v320
    %v325 = vmul.f32 %v324, 1.442695
    %v326 = vpow.pop %v325
    %v327 = vsub.f32 %v318, %v320
    %v328 = vmul.f32 %v327, 1.442695
    %v329 = vpow.pop %v328
    %v330 = vadd.f32 %v323, %v326
    %v331 = vadd.f32 %v330, %v329
    %v332 = vrcp.pop %v331
    %v333 = vmul.f32 %v323, %v332
    %v334 = vmul.f32 %v333, %v194
    %v335 = vmul.f32 %v333, %v195
    %v336 = vmul.f32 %v326, %v332
    %v337 = vmul.f32 %v336, %v196
    %v338 = vmul.f32 %v336, %v197
    %v339 = vadd.f32 %v334, %v337
    %v340 = vadd.f32 %v335, %v338
    %v341 = vmul.f32 %v329, %v332
    %v342 = vmul.f32 %v341, %v198
    %v343 = vmul.f32 %v341, %v199
    %v344 = vadd.f32 %v339, %v342
    %v345 = vadd.f32 %v340, %v343
    %346 = vst.msk [vmem:[#allocation2] sm:$0xff] %vm36, %v344
    %347 = vst.msk [vmem:[#allocation2 + $0x8] sm:$0xff] %vm36, %v345
    // Predicated region
    $region34: #{tpu_custom_call.1} parent=1 // pred_check
      _
    $region35: #{tpu_custom_call.1} parent=1 // pred_check_branch
      %349 = sbr.rel (0) target = $region37
    $region36: #{tpu_custom_call.1} parent=1 // pred_region
      %351 = vsyncadd [#allocation3], 0
      %s352 = sshll.u32 [#allocation2], 4
      %s353 = int_to_ptr.vmem [resolvable:$true] %s352
      %s354 = sshll.u32 %s8, 4
      %s355 = int_to_ptr.hbm [resolvable:$true] %s354
      %360 = dma.vmem_to_hbm [thread:$0]  %s353, 256, %s355, [#allocation3], 128, 128, 8
    $region37: #{tpu_custom_call.1} parent=1 // pred_fallthru
      _
    // Predicated region
    $region38: #{tpu_custom_call.1} parent=1 // pred_check
      _
    $region39: #{tpu_custom_call.1} parent=1 // pred_check_branch
      %362 = sbr.rel (0) target = $region41
    $region40: #{tpu_custom_call.1} parent=1 // pred_region
      %364 = dma.done [#allocation3], 256
    $region41: #{tpu_custom_call.1} parent=1 // pred_fallthru
      _
    %365 = vsyncpa [#allocation3], 1

</llo_original>
